<compile_context>
chip_gen: v6e
topology: v6e:2x2x1
jax: 0.10.0
libtpu: 0.0.40
codegen_flags: <defaults>
</compile_context>

<pallas_src>
import jax
import jax.numpy as jnp
from jax.experimental import pallas as pl
from jax.experimental.pallas import tpu as pltpu


def _round_up(x, m):
    return ((x + m - 1) // m) * m


def nin_kernel(x_ref, w_ref, b_ref, o_ref):
    # x_ref: (nb, C_in, tile)   w_ref: (C_out, C_in)
    # b_ref: (C_out, 1) f32     o_ref: (nb, C_out, tile)
    w = w_ref[...]
    b = b_ref[...].astype(jnp.float32)
    for i in range(x_ref.shape[0]):  # nb is static -> unrolled at trace time
        acc = jnp.dot(w, x_ref[i], preferred_element_type=jnp.float32)
        o_ref[i] = (acc + b).astype(o_ref.dtype)


def _const_block_spec(shape, index_map):
    """Block whose index_map is constant over the grid: single-buffer it."""
    try:
        return pl.BlockSpec(shape, index_map, pipeline_mode=pl.Buffered(1))
    except TypeError:  # fall back if this BlockSpec signature lacks pipeline_mode
        return pl.BlockSpec(shape, index_map)


def nin_forward(x_nchw, v, g, bias):
    """nin forward.

    x_nchw: (B, C_in, H, W); v: (C_out, C_in); g: (C_out,); bias: (C_out,).
    Returns (B, C_out, H, W).
    """
    B, C_in, H, W = x_nchw.shape
    C_out = v.shape[0]
    HW = H * W
    dtype = x_nchw.dtype
    itemsize = jnp.dtype(dtype).itemsize

    # --- weight_norm (default dim=0 for Linear): per-output-row normalization
    v32 = v.astype(jnp.float32)
    row_norm = jnp.sqrt(jnp.sum(v32 * v32, axis=1, keepdims=True))
    w = (g.astype(jnp.float32)[:, None] * v32 / row_norm).astype(dtype)
    b2d = bias.reshape(C_out, 1).astype(jnp.float32)  # keep bias in f32

    # --- NCHW -> (B, C_in, H*W): contiguous reshape, no extra HBM pass ------
    x3d = x_nchw.reshape(B, C_in, HW)

    # --- generation-aware VMEM budget / per-step traffic target -------------
    try:
        vmem_cap = pltpu.get_tpu_info().vmem_capacity_bytes
    except Exception:
        vmem_cap = 64 * 1024 * 1024  # assume v7x-sized VMEM if query fails
    if vmem_cap <= 96 * 1024 * 1024:     # v7x-class: 64 MiB physical per TC
        act_budget = 26 * 1024 * 1024    # double-buffered activation budget
        vmem_limit = 48 * 1024 * 1024    # leave headroom below physical VMEM
    else:                                # v5e / v6e: 128 MiB physical
        act_budget = 56 * 1024 * 1024
        vmem_limit = 100 * 1024 * 1024
    target_step_bytes = 8 * 1024 * 1024  # x + out HBM traffic per grid step

    # Padding-aware sizing (sublane multiple per dtype; lanes pad to 128).
    sub = {4: 8, 2: 16, 1: 32}.get(itemsize, 8)
    cin_p = _round_up(C_in, sub)
    cout_p = _round_up(C_out, sub)
    const_bytes = (cout_p * _round_up(C_in, 128) * itemsize      # weight (1x)
                   + _round_up(C_out, 8) * 128 * 4)              # f32 bias (1x)
    per_lane = (cin_p + cout_p) * itemsize                       # x + out, per pixel

    max_elems = max(128, (act_budget - const_bytes) // (2 * per_lane))
    desired = max(512, target_step_bytes // per_lane)
    desired = min(desired, max_elems)

    if desired >= HW:
        # Whole image per step; batch several images to amortize step overhead.
        tile = HW
        nb = max(1, min(B, desired // HW, 16))
        while B % nb:
            nb -= 1
    else:
        nb = 1
        tile = max(128, (desired // 128) * 128)

    # Pixel-tile axis first so megacore sharding never keys on a small batch.
    grid = (pl.cdiv(HW, tile), B // nb)

    out3d = pl.pallas_call(
        nin_kernel,
        out_shape=jax.ShapeDtypeStruct((B, C_out, HW), dtype),
        grid_spec=pltpu.PrefetchScalarGridSpec(
            num_scalar_prefetch=0,
            grid=grid,
            in_specs=[
                pl.BlockSpec((nb, C_in, tile), lambda j, bb: (bb, 0, j)),
                _const_block_spec((C_out, C_in), lambda j, bb: (0, 0)),
                _const_block_spec((C_out, 1), lambda j, bb: (0, 0)),
            ],
            out_specs=pl.BlockSpec((nb, C_out, tile), lambda j, bb: (bb, 0, j)),
        ),
        compiler_params=pltpu.CompilerParams(
            dimension_semantics=("parallel", "parallel"),
            vmem_limit_bytes=vmem_limit,
        ),
    )(x3d, w, b2d)

    return out3d.reshape(B, C_out, H, W)


def nin_reference(x_nchw, v, g, bias):
    row_norm = jnp.sqrt(jnp.sum(v ** 2, axis=1, keepdims=True))
    w = g[:, None] * v / row_norm
    x_bhwc = jnp.transpose(x_nchw, (0, 2, 3, 1))
    out = jnp.einsum("bhwi,oi->bhwo", x_bhwc, w) + bias
    return jnp.transpose(out, (0, 3, 1, 2))


if __name__ == "__main__":
    key = jax.random.PRNGKey(0)
    k_x, k_v, k_g, k_b = jax.random.split(key, 4)

    B, C_in, H, W = 2, 4, 16, 16
    C_out = 8

    x = jax.random.normal(k_x, (B, C_in, H, W), dtype=jnp.float32)
    v = jax.random.normal(k_v, (C_out, C_in), dtype=jnp.float32) * 0.1
    g = jax.random.normal(k_g, (C_out,), dtype=jnp.float32) * 0.1 + 1.0
    bias = jax.random.normal(k_b, (C_out,), dtype=jnp.float32) * 0.1

    out = nin_forward(x, v, g, bias)
    out = jax.block_until_ready(out)

    ref = nin_reference(x, v, g, bias)
    assert out.shape == (B, C_out, H, W), out.shape
    assert jnp.allclose(out, ref, atol=1e-5, rtol=1e-5), "mismatch vs reference"

    print("KERNEL_OK")
</pallas_src>

<mosaic_0001>
module attributes {stable_mosaic.version = 11 : i64} {
  func.func @nin_kernel(%arg0: i32, %arg1: i32, %arg2: memref<2x4x256xf32, #tpu.memory_space<vmem>>, %arg3: memref<8x4xf32, #tpu.memory_space<vmem>>, %arg4: memref<8x1xf32, #tpu.memory_space<vmem>>, %arg5: memref<2x8x256xf32, #tpu.memory_space<vmem>>) attributes {dimension_semantics = [#tpu.dimension_semantics<parallel>, #tpu.dimension_semantics<parallel>], iteration_bounds = array<i64: 1, 1>, scalar_prefetch = 0 : i64, scratch_operands = 0 : i64, tpu.core_type = #tpu.core_type<tc>, window_params = [{transform_indices = @transform_0, window_bounds = array<i64: 2, 4, 256>}, {pipeline_mode = #tpu.pipeline_mode<synchronous>, transform_indices = @transform_1, window_bounds = array<i64: 8, 4>}, {pipeline_mode = #tpu.pipeline_mode<synchronous>, transform_indices = @transform_2, window_bounds = array<i64: 8, 1>}, {transform_indices = @transform_3, window_bounds = array<i64: 2, 8, 256>}]} {
    %c0 = arith.constant 0 : index
    %c0_0 = arith.constant 0 : index
    %0 = vector.load %arg3[%c0, %c0_0] : memref<8x4xf32, #tpu.memory_space<vmem>>, vector<8x4xf32>
    %c0_1 = arith.constant 0 : index
    %c0_2 = arith.constant 0 : index
    %1 = vector.load %arg4[%c0_1, %c0_2] : memref<8x1xf32, #tpu.memory_space<vmem>>, vector<8x1xf32>
    %c0_3 = arith.constant 0 : index
    %c0_4 = arith.constant 0 : index
    %c0_5 = arith.constant 0 : index
    %2 = vector.load %arg2[%c0_3, %c0_4, %c0_5] : memref<2x4x256xf32, #tpu.memory_space<vmem>>, vector<1x4x256xf32>
    %3 = vector.shape_cast %2 : vector<1x4x256xf32> to vector<4x256xf32>
    %cst = arith.constant dense<0.000000e+00> : vector<8x256xf32>
    %4 = tpu.matmul %0, %3, %cst {dimension_numbers = #tpu.dot_dimension_numbers<[1], [0], [0], [1], [0, 0, 1, 1], [], []>} : vector<8x4xf32>, vector<4x256xf32>, vector<8x256xf32> -> vector<8x256xf32>
    %5 = vector.broadcast %1 : vector<8x1xf32> to vector<8x256xf32>
    %6 = arith.addf %4, %5 : vector<8x256xf32>
    %c0_6 = arith.constant 0 : index
    %c0_7 = arith.constant 0 : index
    %c0_8 = arith.constant 0 : index
    %7 = vector.load %arg5[%c0_6, %c0_7, %c0_8] : memref<2x8x256xf32, #tpu.memory_space<vmem>>, vector<1x8x256xf32>
    %8 = vector.shape_cast %7 : vector<1x8x256xf32> to vector<8x256xf32>
    %9 = vector.shape_cast %6 : vector<8x256xf32> to vector<1x8x256xf32>
    tpu.vector_store %arg5[%c0_6, %c0_7, %c0_8], %9 {strides = array<i32>} : memref<2x8x256xf32, #tpu.memory_space<vmem>>, vector<1x8x256xf32>,
    %c1 = arith.constant 1 : index
    %c0_9 = arith.constant 0 : index
    %c0_10 = arith.constant 0 : index
    %10 = vector.load %arg2[%c1, %c0_9, %c0_10] : memref<2x4x256xf32, #tpu.memory_space<vmem>>, vector<1x4x256xf32>
    %11 = vector.shape_cast %10 : vector<1x4x256xf32> to vector<4x256xf32>
    %cst_11 = arith.constant dense<0.000000e+00> : vector<8x256xf32>
    %12 = tpu.matmul %0, %11, %cst_11 {dimension_numbers = #tpu.dot_dimension_numbers<[1], [0], [0], [1], [0, 0, 1, 1], [], []>} : vector<8x4xf32>, vector<4x256xf32>, vector<8x256xf32> -> vector<8x256xf32>
    %13 = vector.broadcast %1 : vector<8x1xf32> to vector<8x256xf32>
    %14 = arith.addf %12, %13 : vector<8x256xf32>
    %c1_12 = arith.constant 1 : index
    %c0_13 = arith.constant 0 : index
    %c0_14 = arith.constant 0 : index
    %15 = vector.load %arg5[%c1_12, %c0_13, %c0_14] : memref<2x8x256xf32, #tpu.memory_space<vmem>>, vector<1x8x256xf32>
    %16 = vector.shape_cast %15 : vector<1x8x256xf32> to vector<8x256xf32>
    %17 = vector.shape_cast %14 : vector<8x256xf32> to vector<1x8x256xf32>
    tpu.vector_store %arg5[%c1_12, %c0_13, %c0_14], %17 {strides = array<i32>} : memref<2x8x256xf32, #tpu.memory_space<vmem>>, vector<1x8x256xf32>,
    return
  }
  func.func @transform_0(%arg0: i32, %arg1: i32) -> (i32, i32, i32) {
    %c0_i32 = arith.constant 0 : i32
    %c0_i32_0 = arith.constant 0 : i32
    return %arg1, %c0_i32, %arg0 : i32, i32, i32
  }
  func.func @transform_1(%arg0: i32, %arg1: i32) -> (i32, i32) {
    %c0_i32 = arith.constant 0 : i32
    %c0_i32_0 = arith.constant 0 : i32
    %c0_i32_1 = arith.constant 0 : i32
    return %c0_i32, %c0_i32_0 : i32, i32
  }
  func.func @transform_2(%arg0: i32, %arg1: i32) -> (i32, i32) {
    %c0_i32 = arith.constant 0 : i32
    %c0_i32_0 = arith.constant 0 : i32
    %c0_i32_1 = arith.constant 0 : i32
    return %c0_i32, %c0_i32_0 : i32, i32
  }
  func.func @transform_3(%arg0: i32, %arg1: i32) -> (i32, i32, i32) {
    %c0_i32 = arith.constant 0 : i32
    %c0_i32_0 = arith.constant 0 : i32
    return %arg1, %c0_i32, %arg0 : i32, i32, i32
  }
}

</mosaic_0001>

<llo_original>
// kernel: tpu_custom_call.1
$region0: #{tpu_custom_call.1}
  #allocation0 [shape = 'u32[]', space=smem, size = 0x4, offset = 0x4, fixed_abs, tag = 'smem constant byte address 0x4 - core index']
  #allocation1 [shape = 'u32[144,128]{1,0:T(1,128)}', space=vmem, size = 0x12000, scoped, tag = 'internal scratch']
  %s0 = inlined_call_operand.vmem [shape: f32[2,4,256], index: 0, kind: input, shape index: {}]
  %s1 = inlined_call_operand.vmem [shape: f32[8,4], index: 1, kind: input, shape index: {}]
  %s2 = inlined_call_operand.vmem [shape: f32[8,1], index: 2, kind: input, shape index: {}]
  %s3 = inlined_call_operand.hbm [shape: f32[2,8,256], index: 3, kind: output, shape index: {}]
  %s4 = sld [smem:[#allocation0]]
  $region22: #{tpu_custom_call.1} parent=0
    _
  %s6 = ssub.s32 1, %s4
  %s7 = scalar_select 0, %s6, %s4
  $region1: #{tpu_custom_call.1} parent=0
    #allocation2 [shape = 'u8[16384]{0}', space=vmem, size = 0x4000, scoped, tag = 'output window, operand 0, single buffered']
    #allocation3 [shape = 's32[1]{0}', space=sflag, size = 0x4, scoped, tag = 'scoped memory for tpu_custom_call.1']
    %8 = vsyncpa [#allocation3], 0
    // Predicated region
    $region2: #{tpu_custom_call.1} parent=1 // pred_check
      _
    $region3: #{tpu_custom_call.1} parent=1 // pred_check_branch
      %10 = sbr.rel (0) target = $region5
    $region4: #{tpu_custom_call.1} parent=1 // pred_region
      _
    $region5: #{tpu_custom_call.1} parent=1 // pred_fallthru
      _
    // Predicated region
    $region6: #{tpu_custom_call.1} parent=1 // pred_check
      _
    $region7: #{tpu_custom_call.1} parent=1 // pred_check_branch
      %12 = sbr.rel (0) target = $region9
    $region8: #{tpu_custom_call.1} parent=1 // pred_region
      _
    $region9: #{tpu_custom_call.1} parent=1 // pred_fallthru
      _
    // Predicated region
    $region10: #{tpu_custom_call.1} parent=1 // pred_check
      _
    $region11: #{tpu_custom_call.1} parent=1 // pred_check_branch
      %14 = sbr.rel (0) target = $region13
    $region12: #{tpu_custom_call.1} parent=1 // pred_region
      _
    $region13: #{tpu_custom_call.1} parent=1 // pred_fallthru
      _
    %v15 = vld [vmem:[%s1] sm:$0xff]
    %v16 = vld [vmem:[%s2] sm:$0xff]
    %v17 = vld [vmem:[%s0] sm:$0xff]
    %19 = vset.pattern.permute.xlu0 0
    %20 = vperm.xlu0 %19, %v16
    %v21 = vpop.permute.xlu0 %20
    %v24 = vcombine.high %v17, %v17
    %vm25 = vcmask 31744
    %v27 = vsel %vm25, %v15, 0
    %vm29 = vcmask 1043456
    %v30 = vsel %vm29, %v17, 0
    %v32 = vsel %vm29, %v24, 0
    %34 = vmatprep.subr.mxu0 0.0
    %35 = vmatpush1.msra.mxu0 0.0
    %36 = vmatprep.subr.mxu0 0.0
    %37 = vmatpush1.msra.mxu0 0.0
    %38 = vmatprep.subr.mxu0 0.0
    %39 = vmatpush1.msra.mxu0 0.0
    %40 = vmatprep.subr.mxu0 0.0
    %41 = vmatpush1.msra.mxu0 0.0
    %42 = vmatprep.subr.mxu0 0.0
    %43 = vmatpush1.msra.mxu0 0.0
    %44 = vmatprep.subr.mxu0 0.0
    %45 = vmatpush1.msra.mxu0 0.0
    %46 = vmatprep.subr.mxu0 0.0
    %47 = vmatpush1.msra.mxu0 0.0
    %48 = vmatprep.subr.mxu0 0.0
    %49 = vmatpush1.msra.mxu0 0.0
    %50 = vmatprep.subr.mxu0 0.0
    %51 = vmatpush1.msra.mxu0 0.0
    %52 = vmatprep.subr.mxu0 0.0
    %53 = vmatpush1.msra.mxu0 0.0
    %54 = vmatprep.subr.mxu0 0.0
    %55 = vmatpush1.msra.mxu0 0.0
    %56 = vmatprep.subr.mxu0 0.0
    %57 = vmatpush1.msra.mxu0 0.0
    %58 = vmatprep.subr.mxu0 0.0
    %59 = vmatpush1.msra.mxu0 0.0
    %60 = vmatprep.subr.mxu0 0.0
    %61 = vmatpush1.msra.mxu0 0.0
    %62 = vmatprep.subr.mxu0 0.0
    %63 = vmatpush1.msra.mxu0 0.0
    %64 = vmatprep.subr.mxu0 %v32
    %65 = vmatpush1.msra.mxu0 %v30
    %66 = vmatprep.subr.mxu0 0.0
    %67 = vmatpush2.msra.mxu0 0.0
    %68 = vmatprep.subr.mxu0 0.0
    %69 = vmatpush2.msra.mxu0 0.0
    %70 = vmatprep.subr.mxu0 0.0
    %71 = vmatpush2.msra.mxu0 0.0
    %72 = vmatprep.subr.mxu0 0.0
    %73 = vmatpush2.msra.mxu0 0.0
    %74 = vmatprep.subr.mxu0 0.0
    %75 = vmatpush2.msra.mxu0 0.0
    %76 = vmatprep.subr.mxu0 0.0
    %77 = vmatpush2.msra.mxu0 0.0
    %78 = vmatprep.subr.mxu0 0.0
    %79 = vmatpush2.msra.mxu0 0.0
    %80 = vmatprep.subr.mxu0 0.0
    %81 = vmatpush2.msra.mxu0 0.0
    %82 = vmatprep.subr.mxu0 0.0
    %83 = vmatpush2.msra.mxu0 0.0
    %84 = vmatprep.subr.mxu0 0.0
    %85 = vmatpush2.msra.mxu0 0.0
    %86 = vmatprep.subr.mxu0 0.0
    %87 = vmatpush2.msra.mxu0 0.0
    %88 = vmatprep.subr.mxu0 0.0
    %89 = vmatpush2.msra.mxu0 0.0
    %90 = vmatprep.subr.mxu0 0.0
    %91 = vmatpush2.msra.mxu0 0.0
    %92 = vmatprep.subr.mxu0 0.0
    %93 = vmatpush2.msra.mxu0 0.0
    %94 = vmatprep.subr.mxu0 0.0
    %95 = vmatpush2.msra.mxu0 0.0
    %96 = vmatprep.subr.mxu0 0.0
    %97 = vmatpush2.msra.mxu0 0.0
    %98 = vmatprep.mubr.f32.mxu0 0.0
    %99 = vmatmul.mubr.f32.gmra.mxu0 %v27
    %v100 = vpop.f32.mrf.mxu0
    %v101 = vadd.f32 %v21, %v100
    %v102 = vpop.f32.mrf.mxu0
    %v103 = vadd.f32 %v21, %v102
    %104 = vdwg.mxu0
    %105 = vst [vmem:[#allocation2] sm:$0xff] %v101
    %106 = vst [vmem:[#allocation2 + $0x8] sm:$0xff] %v103
    %s107 = scalar_lea.vmem %s0, 8
    %v108 = vld [vmem:[%s107] sm:$0xff]
    %v110 = vcombine.high %v108, %v108
    %v111 = vsel %vm29, %v108, 0
    %v113 = vsel %vm29, %v110, 0
    %115 = vmatprep.subr.mxu0 0.0
    %116 = vmatpush1.msra.mxu0 0.0
    %117 = vmatprep.subr.mxu0 0.0
    %118 = vmatpush1.msra.mxu0 0.0
    %119 = vmatprep.subr.mxu0 0.0
    %120 = vmatpush1.msra.mxu0 0.0
    %121 = vmatprep.subr.mxu0 0.0
    %122 = vmatpush1.msra.mxu0 0.0
    %123 = vmatprep.subr.mxu0 0.0
    %124 = vmatpush1.msra.mxu0 0.0
    %125 = vmatprep.subr.mxu0 0.0
    %126 = vmatpush1.msra.mxu0 0.0
    %127 = vmatprep.subr.mxu0 0.0
    %128 = vmatpush1.msra.mxu0 0.0
    %129 = vmatprep.subr.mxu0 0.0
    %130 = vmatpush1.msra.mxu0 0.0
    %131 = vmatprep.subr.mxu0 0.0
    %132 = vmatpush1.msra.mxu0 0.0
    %133 = vmatprep.subr.mxu0 0.0
    %134 = vmatpush1.msra.mxu0 0.0
    %135 = vmatprep.subr.mxu0 0.0
    %136 = vmatpush1.msra.mxu0 0.0
    %137 = vmatprep.subr.mxu0 0.0
    %138 = vmatpush1.msra.mxu0 0.0
    %139 = vmatprep.subr.mxu0 0.0
    %140 = vmatpush1.msra.mxu0 0.0
    %141 = vmatprep.subr.mxu0 0.0
    %142 = vmatpush1.msra.mxu0 0.0
    %143 = vmatprep.subr.mxu0 0.0
    %144 = vmatpush1.msra.mxu0 0.0
    %145 = vmatprep.subr.mxu0 %v113
    %146 = vmatpush1.msra.mxu0 %v111
    %147 = vmatprep.subr.mxu0 0.0
    %148 = vmatpush2.msra.mxu0 0.0
    %149 = vmatprep.subr.mxu0 0.0
    %150 = vmatpush2.msra.mxu0 0.0
    %151 = vmatprep.subr.mxu0 0.0
    %152 = vmatpush2.msra.mxu0 0.0
    %153 = vmatprep.subr.mxu0 0.0
    %154 = vmatpush2.msra.mxu0 0.0
    %155 = vmatprep.subr.mxu0 0.0
    %156 = vmatpush2.msra.mxu0 0.0
    %157 = vmatprep.subr.mxu0 0.0
    %158 = vmatpush2.msra.mxu0 0.0
    %159 = vmatprep.subr.mxu0 0.0
    %160 = vmatpush2.msra.mxu0 0.0
    %161 = vmatprep.subr.mxu0 0.0
    %162 = vmatpush2.msra.mxu0 0.0
    %163 = vmatprep.subr.mxu0 0.0
    %164 = vmatpush2.msra.mxu0 0.0
    %165 = vmatprep.subr.mxu0 0.0
    %166 = vmatpush2.msra.mxu0 0.0
    %167 = vmatprep.subr.mxu0 0.0
    %168 = vmatpush2.msra.mxu0 0.0
    %169 = vmatprep.subr.mxu0 0.0
    %170 = vmatpush2.msra.mxu0 0.0
    %171 = vmatprep.subr.mxu0 0.0
    %172 = vmatpush2.msra.mxu0 0.0
    %173 = vmatprep.subr.mxu0 0.0
    %174 = vmatpush2.msra.mxu0 0.0
    %175 = vmatprep.subr.mxu0 0.0
    %176 = vmatpush2.msra.mxu0 0.0
    %177 = vmatprep.subr.mxu0 0.0
    %178 = vmatpush2.msra.mxu0 0.0
    %179 = vmatprep.mubr.f32.mxu0 0.0
    %180 = vmatmul.mubr.f32.gmra.mxu0 %v27
    %v181 = vpop.f32.mrf.mxu0
    %v182 = vadd.f32 %v21, %v181
    %v183 = vpop.f32.mrf.mxu0
    %v184 = vadd.f32 %v21, %v183
    %185 = vdwg.mxu0
    %s186 = scalar_lea.vmem [#allocation2], 16
    %187 = vst [vmem:[%s186] sm:$0xff] %v182
    %188 = vst [vmem:[%s186 + $0x8] sm:$0xff] %v184
    // Predicated region
    $region14: #{tpu_custom_call.1} parent=1 // pred_check
      _
    $region15: #{tpu_custom_call.1} parent=1 // pred_check_branch
      %190 = sbr.rel (0) target = $region17
    $region16: #{tpu_custom_call.1} parent=1 // pred_region
      %s192 = ssub.s32 512, 512
      %193 = vsyncadd [#allocation3], %s192
      %s194 = sshll.u32 [#allocation2], 4
      %s195 = int_to_ptr.vmem [resolvable:$true] %s194
      %200 = dma.vmem_to_hbm [thread:$0]  %s195, 512, %s3, [#allocation3], 256, 256, 16
    $region17: #{tpu_custom_call.1} parent=1 // pred_fallthru
      _
    // Predicated region
    $region18: #{tpu_custom_call.1} parent=1 // pred_check
      _
    $region19: #{tpu_custom_call.1} parent=1 // pred_check_branch
      %202 = sbr.rel (0) target = $region21
    $region20: #{tpu_custom_call.1} parent=1 // pred_region
      %203 = dma.done [#allocation3], 512
    $region21: #{tpu_custom_call.1} parent=1 // pred_fallthru
      _
    %204 = vsyncpa [#allocation3], 1

</llo_original>
